<compile_context>
chip_gen: v5e
topology: v5e:2x2
jax: 0.10.0
libtpu: 0.0.40
codegen_flags: <defaults>
</compile_context>

<pallas_src>
import functools
import numpy as np
import jax
import jax.numpy as jnp
from jax.experimental import pallas as pl
from jax.experimental.pallas import tpu as pltpu

F32 = jnp.float32
BF16 = jnp.bfloat16


def _round_up(x, m):
    return (x + m - 1) // m * m


# ----------------------------------------------------------------------------
# Pallas kernels
# ----------------------------------------------------------------------------
def _conv3x3_kernel(x0_ref, x1_ref, x2_ref, w_ref, b_ref, o_ref, *, act):
    """Direct 3x3 conv for one output row and one Cout block.

    x{0,1,2}_ref: (1, 1, W+2, Cin) bf16  -- padded input rows h+0, h+1, h+2
    w_ref:        (9, Cin, tn)     bf16  -- taps (dh*3+dw), BN scale folded in
    b_ref:        (1, tn)          f32
    o_ref:        (1, 1, W, tn)
    """
    w_out = o_ref.shape[2]
    tn = o_ref.shape[3]
    acc = jnp.zeros((w_out, tn), jnp.float32)
    for dh, xr in enumerate((x0_ref, x1_ref, x2_ref)):
        row = xr[0, 0]                                   # [W+2, Cin] bf16
        for dw in range(3):
            a = row[dw:dw + w_out, :]                    # [W, Cin]
            acc = acc + jnp.dot(a, w_ref[3 * dh + dw],
                                preferred_element_type=jnp.float32)
    y = acc + b_ref[...]
    if act == "relu":
        y = jnp.maximum(y, 0.0)
    elif act == "sigmoid":
        y = jax.nn.sigmoid(y)
    o_ref[0, 0] = y.astype(o_ref.dtype)


def _max4_kernel(a_ref, b_ref, c_ref, d_ref, o_ref):
    o_ref[...] = jnp.maximum(jnp.maximum(a_ref[...], b_ref[...]),
                             jnp.maximum(c_ref[...], d_ref[...]))


def _row_interp_kernel(m_ref, x_ref, o_ref):
    """out[r] = Mw @ x[r] for a block of tb rows. m:(Wo,Wi), x:(tb,Wi,C), o:(tb,Wo,C)."""
    tb = x_ref.shape[0]
    m = m_ref[...]
    for r in range(tb):
        o_ref[r] = jnp.dot(m, x_ref[r],
                           preferred_element_type=jnp.float32).astype(o_ref.dtype)


def _pw_kernel(a_ref, w_ref, b_ref, o_ref, *, act):
    """1x1 conv: o = act(a @ w + b). a:(tm,K) bf16, w:(K,N) bf16, b:(1,N) f32."""
    y = jnp.dot(a_ref[...], w_ref[...], preferred_element_type=jnp.float32) + b_ref[...]
    if act == "relu":
        y = jnp.maximum(y, 0.0)
    elif act == "sigmoid":
        y = jax.nn.sigmoid(y)
    o_ref[...] = y.astype(o_ref.dtype)


# ----------------------------------------------------------------------------
# Layer wrappers (NHWC, bf16 activations)
# ----------------------------------------------------------------------------
def conv3x3_bn_relu(x, w_hwio, scale, bias, act="relu", out_dtype=BF16):
    """3x3 conv (pad=1, no bias) + folded BN + ReLU. x:[B,H,W,Cin], w:[3,3,Cin,Cout]."""
    B, H, W, C = x.shape
    Cout = w_hwio.shape[-1]
    # Fold BN scale into the weight columns at trace time; bf16 MXU operands.
    w9 = (w_hwio.reshape(9, C, Cout) * scale.reshape(1, 1, Cout)).astype(BF16)
    b2 = bias.reshape(1, Cout).astype(F32)
    xp = jnp.pad(x.astype(BF16), ((0, 0), (1, 1), (1, 1), (0, 0)))   # spatial halo
    tn = min(256, Cout)           # Cout in {64,128,256,512,1024} -> tn divides Cout
    nblk = Cout // tn

    def x_spec(dh):
        return pl.BlockSpec((1, 1, W + 2, C),
                            lambda j, b, h, dh=dh: (b, h + dh, 0, 0))

    out = pl.pallas_call(
        functools.partial(_conv3x3_kernel, act=act),
        out_shape=jax.ShapeDtypeStruct((B, H, W, Cout), out_dtype),
        grid_spec=pltpu.PrefetchScalarGridSpec(
            num_scalar_prefetch=0,
            grid=(nblk, B, H),        # Cout block slowest -> weight block stays resident
            in_specs=[
                x_spec(0), x_spec(1), x_spec(2),          # same array, 3 row offsets
                pl.BlockSpec((9, C, tn), lambda j, b, h: (0, 0, j)),
                pl.BlockSpec((1, tn), lambda j, b, h: (0, j)),
            ],
            out_specs=pl.BlockSpec((1, 1, W, tn), lambda j, b, h: (b, h, 0, j)),
        ),
        compiler_params=pltpu.CompilerParams(
            dimension_semantics=("parallel", "parallel", "parallel"),
            vmem_limit_bytes=32 * 1024 * 1024),
    )(xp, xp, xp, w9, b2)
    return out


def double_conv(x, p):
    x = conv3x3_bn_relu(x, p["w1"], p["s1"], p["b1"])
    x = conv3x3_bn_relu(x, p["w2"], p["s2"], p["b2"])
    return x


def max4(a, b, c, d):
    """Elementwise max of four [M, C] arrays, gridded over M (scales to any size)."""
    M, C = a.shape
    tm = min(512, _round_up(M, 8))
    Mp = _round_up(M, tm)

    def padm(t):
        return jnp.pad(t, ((0, Mp - M), (0, 0))) if Mp != M else t

    spec = pl.BlockSpec((tm, C), lambda i: (i, 0))
    out = pl.pallas_call(
        _max4_kernel,
        out_shape=jax.ShapeDtypeStruct((Mp, C), a.dtype),
        grid_spec=pltpu.PrefetchScalarGridSpec(
            num_scalar_prefetch=0, grid=(Mp // tm,),
            in_specs=[spec, spec, spec, spec],
            out_specs=spec),
        compiler_params=pltpu.CompilerParams(dimension_semantics=("parallel",)),
    )(padm(a), padm(b), padm(c), padm(d))
    return out[:M]


def maxpool2x2(x):
    B, H, W, C = x.shape
    Ho, Wo = H // 2, W // 2
    x6 = x.reshape(B, Ho, 2, Wo, 2, C)
    a = x6[:, :, 0, :, 0, :].reshape(-1, C)
    b = x6[:, :, 0, :, 1, :].reshape(-1, C)
    c = x6[:, :, 1, :, 0, :].reshape(-1, C)
    d = x6[:, :, 1, :, 1, :].reshape(-1, C)
    return max4(a, b, c, d).reshape(B, Ho, Wo, C)


def _interp_matrix_1d(n_in, n_out):
    """Bilinear align_corners=True interpolation matrix [n_out, n_in] (numpy const)."""
    M = np.zeros((n_out, n_in), np.float32)
    if n_in == 1:
        M[:, 0] = 1.0
        return M
    scale = (n_in - 1) / (n_out - 1)
    for i in range(n_out):
        src = i * scale
        i0 = min(int(np.floor(src)), n_in - 1)
        i1 = min(i0 + 1, n_in - 1)
        f = src - i0
        M[i, i0] += 1.0 - f
        M[i, i1] += f
    return M


def _interp_indices_1d(n_in, n_out):
    if n_in == 1:
        z = np.zeros(n_out, np.int32)
        return z, z, np.zeros(n_out, np.float32)
    scale = (n_in - 1) / (n_out - 1)
    src = np.arange(n_out) * scale
    lo = np.minimum(np.floor(src).astype(np.int32), n_in - 1)
    hi = np.minimum(lo + 1, n_in - 1)
    frac = (src - lo).astype(np.float32)
    return lo, hi, frac


def upsample2x_bilinear(x):
    """nn.Upsample(scale_factor=2, bilinear, align_corners=True), NHWC, separable."""
    B, Hi, Wi, C = x.shape
    Ho, Wo = 2 * Hi, 2 * Wi
    # --- H pass: 2-tap lerp (XLA glue) ---
    lo, hi, frac = _interp_indices_1d(Hi, Ho)
    xl = jnp.take(x, jnp.asarray(lo), axis=1).astype(F32)
    xh = jnp.take(x, jnp.asarray(hi), axis=1).astype(F32)
    f = jnp.asarray(frac).reshape(1, Ho, 1, 1)
    y1 = (xl * (1.0 - f) + xh * f).astype(BF16)                  # [B, Ho, Wi, C]
    # --- W pass: out_row = Mw @ row (Pallas) ---
    if Wi == 1:                                                   # degenerate 1-wide map
        return jnp.broadcast_to(y1, (B, Ho, Wo, C))
    Mw = jnp.asarray(_interp_matrix_1d(Wi, Wo), BF16)             # [Wo, Wi]
    rows = y1.reshape(B * Ho, Wi, C)
    n = B * Ho
    tb = next(t for t in (8, 4, 2, 1) if n % t == 0)
    out = pl.pallas_call(
        _row_interp_kernel,
        out_shape=jax.ShapeDtypeStruct((n, Wo, C), BF16),
        grid_spec=pltpu.PrefetchScalarGridSpec(
            num_scalar_prefetch=0, grid=(n // tb,),
            in_specs=[pl.BlockSpec((Wo, Wi), lambda i: (0, 0)),
                      pl.BlockSpec((tb, Wi, C), lambda i: (i, 0, 0))],
            out_specs=pl.BlockSpec((tb, Wo, C), lambda i: (i, 0, 0))),
        compiler_params=pltpu.CompilerParams(dimension_semantics=("parallel",)),
    )(Mw, rows)
    return out.reshape(B, Ho, Wo, C)


def up_sample_squash(x, p):
    return double_conv(upsample2x_bilinear(x), p)


def final_conv_sigmoid(x, p):
    """1x1 conv + sigmoid. x:[B,H,W,64] bf16 -> [B,H,W,out_ch] f32."""
    B, H, W, C = x.shape
    out_ch = p["w"].shape[-1]
    M = B * H * W
    a = x.reshape(M, C).astype(BF16)
    tm = min(512, _round_up(M, 8))
    Mp = _round_up(M, tm)
    if Mp != M:
        a = jnp.pad(a, ((0, Mp - M), (0, 0)))
    w = p["w"].astype(BF16)
    b = p["b"].reshape(1, out_ch).astype(F32)
    out = pl.pallas_call(
        functools.partial(_pw_kernel, act="sigmoid"),
        out_shape=jax.ShapeDtypeStruct((Mp, out_ch), F32),
        grid_spec=pltpu.PrefetchScalarGridSpec(
            num_scalar_prefetch=0, grid=(Mp // tm,),
            in_specs=[pl.BlockSpec((tm, C), lambda i: (i, 0)),
                      pl.BlockSpec((C, out_ch), lambda i: (0, 0)),
                      pl.BlockSpec((1, out_ch), lambda i: (0, 0))],
            out_specs=pl.BlockSpec((tm, out_ch), lambda i: (i, 0))),
        compiler_params=pltpu.CompilerParams(dimension_semantics=("parallel",)),
    )(a, w, b)
    return out[:M].reshape(B, H, W, out_ch)


# ----------------------------------------------------------------------------
# Parameter initialization (deterministic, synthetic)
# ----------------------------------------------------------------------------
def _init_double_conv(key, in_ch, mid_ch, out_ch):
    k1, k2, k3, k4, k5, k6 = jax.random.split(key, 6)
    eps = 1e-5
    w1 = jax.random.normal(k1, (3, 3, in_ch, mid_ch), F32) * np.sqrt(2.0 / (9 * in_ch))
    g1 = 1.0 + 0.1 * jax.random.normal(k2, (mid_ch,), F32)
    be1 = 0.1 * jax.random.normal(k3, (mid_ch,), F32)
    w2 = jax.random.normal(k4, (3, 3, mid_ch, out_ch), F32) * np.sqrt(2.0 / (9 * mid_ch))
    g2 = 1.0 + 0.1 * jax.random.normal(k5, (out_ch,), F32)
    be2 = 0.1 * jax.random.normal(k6, (out_ch,), F32)
    # fold eval-mode BN (running_mean=0, running_var=1) into scale/bias
    return {"w1": w1, "s1": g1 / np.sqrt(1.0 + eps), "b1": be1,
            "w2": w2, "s2": g2 / np.sqrt(1.0 + eps), "b2": be2}


def _init_final(key, in_ch, out_ch):
    k1, k2 = jax.random.split(key)
    w = jax.random.normal(k1, (in_ch, out_ch), F32) * (1.0 / np.sqrt(in_ch))
    b = 0.1 * jax.random.normal(k2, (out_ch,), F32)
    return {"w": w, "b": b}


def init_nested_unet_params(key, in_ch, out_ch):
    n1 = 64
    FIL = (n1, n1 * 2, n1 * 4, n1 * 8, n1 * 16)
    names_dc = [
        ("conv0_0", in_ch, FIL[0], FIL[0]),
        ("conv1_0", FIL[0], FIL[1], FIL[1]),
        ("conv2_0", FIL[1], FIL[2], FIL[2]),
        ("conv3_0", FIL[2], FIL[3], FIL[3]),
        ("conv4_0", FIL[3], FIL[4], FIL[4]),
        ("up0_1", FIL[1], FIL[1] // 2, FIL[1] // 2),
        ("up1_1", FIL[2], FIL[2] // 2, FIL[2] // 2),
        ("up0_2", FIL[1], FIL[1] // 2, FIL[1] // 2),
        ("up2_1", FIL[3], FIL[3] // 2, FIL[3] // 2),
        ("up1_2", FIL[2], FIL[2] // 2, FIL[2] // 2),
        ("up0_3", FIL[1], FIL[1] // 2, FIL[1] // 2),
        ("up3_1", FIL[4], FIL[4] // 2, FIL[4] // 2),
        ("up2_2", FIL[3], FIL[3] // 2, FIL[3] // 2),
        ("up1_3", FIL[2], FIL[2] // 2, FIL[2] // 2),
        ("up0_4", FIL[1], FIL[1] // 2, FIL[1] // 2),
    ]
    params = {}
    keys = jax.random.split(key, len(names_dc) + 4)
    for (name, ic, mc, oc), k in zip(names_dc, keys[:len(names_dc)]):
        params[name] = _init_double_conv(k, ic, mc, oc)
    for i, k in enumerate(keys[len(names_dc):]):
        params[f"final{i + 1}"] = _init_final(k, FIL[0], out_ch)
    return params


# ----------------------------------------------------------------------------
# Full forward
# ----------------------------------------------------------------------------
def nested_unet_forward(x_nchw, params):
    """x_nchw: [B, in_ch, H, W] -> tuple of 4 NCHW tensors [B, out_ch, H, W] in (0,1)."""
    x = jnp.transpose(x_nchw, (0, 2, 3, 1)).astype(BF16)   # NCHW -> NHWC, bf16

    # encode
    x0_0 = double_conv(x, params["conv0_0"])
    x1_0 = double_conv(maxpool2x2(x0_0), params["conv1_0"])
    x2_0 = double_conv(maxpool2x2(x1_0), params["conv2_0"])
    x3_0 = double_conv(maxpool2x2(x2_0), params["conv3_0"])
    x4_0 = double_conv(maxpool2x2(x3_0), params["conv4_0"])

    # decode
    x0_1 = up_sample_squash(x1_0, params["up0_1"])
    x1_1 = up_sample_squash(x2_0, params["up1_1"])
    x0_2 = up_sample_squash(x1_1, params["up0_2"])
    x2_1 = up_sample_squash(x3_0, params["up2_1"])
    x1_2 = up_sample_squash(x2_1, params["up1_2"])
    x0_3 = up_sample_squash(x1_2, params["up0_3"])
    x3_1 = up_sample_squash(x4_0, params["up3_1"])
    x2_2 = up_sample_squash(x3_1, params["up2_2"])
    x1_3 = up_sample_squash(x2_2, params["up1_3"])
    x0_4 = up_sample_squash(x1_3, params["up0_4"])

    outs = (
        final_conv_sigmoid(x0_1, params["final1"]),
        final_conv_sigmoid(x0_2, params["final2"]),
        final_conv_sigmoid(x0_3, params["final3"]),
        final_conv_sigmoid(x0_4, params["final4"]),
    )
    # NHWC -> NCHW to match PyTorch output convention
    return tuple(jnp.transpose(o, (0, 3, 1, 2)) for o in outs)


# ----------------------------------------------------------------------------
if __name__ == "__main__":
    B, in_ch, H, W = 2, 4, 16, 16
    out_ch = 2

    key = jax.random.PRNGKey(0)
    k_params, k_x = jax.random.split(key)
    params = init_nested_unet_params(k_params, in_ch, out_ch)
    x = jax.random.normal(k_x, (B, in_ch, H, W), F32)

    outs = nested_unet_forward(x, params)
    outs = jax.block_until_ready(outs)

    expected = (B, out_ch, H, W)
    for o in outs:
        assert o.shape == expected, (o.shape, expected)
        assert bool(jnp.all(jnp.isfinite(o)))
        assert bool(jnp.all((o >= 0.0) & (o <= 1.0))), "sigmoid range violated"
    print("KERNEL_OK")
</pallas_src>

<mosaic_0001>
module attributes {stable_mosaic.version = 11 : i64} {
  func.func @_conv3x3_kernel(%arg0: i32, %arg1: i32, %arg2: i32, %arg3: memref<1x1x18x4xbf16, #tpu.memory_space<vmem>>, %arg4: memref<1x1x18x4xbf16, #tpu.memory_space<vmem>>, %arg5: memref<1x1x18x4xbf16, #tpu.memory_space<vmem>>, %arg6: memref<9x4x64xbf16, #tpu.memory_space<vmem>>, %arg7: memref<1x64xf32, #tpu.memory_space<vmem>>, %arg8: memref<1x1x16x64xbf16, #tpu.memory_space<vmem>>) attributes {dimension_semantics = [#tpu.dimension_semantics<parallel>, #tpu.dimension_semantics<parallel>, #tpu.dimension_semantics<parallel>], iteration_bounds = array<i64: 1, 2, 16>, scalar_prefetch = 0 : i64, scratch_operands = 0 : i64, tpu.core_type = #tpu.core_type<tc>, window_params = [{transform_indices = @transform_0, window_bounds = array<i64: 1, 1, 18, 4>}, {transform_indices = @transform_1, window_bounds = array<i64: 1, 1, 18, 4>}, {transform_indices = @transform_2, window_bounds = array<i64: 1, 1, 18, 4>}, {transform_indices = @transform_3, window_bounds = array<i64: 9, 4, 64>}, {transform_indices = @transform_4, window_bounds = array<i64: 1, 64>}, {transform_indices = @transform_5, window_bounds = array<i64: 1, 1, 16, 64>}]} {
    %cst = arith.constant 0.000000e+00 : f32
    %0 = vector.broadcast %cst : f32 to vector<16x64xf32>
    %c0 = arith.constant 0 : index
    %c0_0 = arith.constant 0 : index
    %c0_1 = arith.constant 0 : index
    %c0_2 = arith.constant 0 : index
    %1 = vector.load %arg3[%c0, %c0_0, %c0_1, %c0_2] : memref<1x1x18x4xbf16, #tpu.memory_space<vmem>>, vector<1x1x18x4xbf16>
    %2 = vector.shape_cast %1 : vector<1x1x18x4xbf16> to vector<18x4xbf16>
    %3 = vector.extract_strided_slice %2 {offsets = [0, 0], sizes = [16, 4], strides = [1, 1]} : vector<18x4xbf16> to vector<16x4xbf16>
    %c0_3 = arith.constant 0 : index
    %c0_4 = arith.constant 0 : index
    %c0_5 = arith.constant 0 : index
    %4 = vector.load %arg6[%c0_3, %c0_4, %c0_5] : memref<9x4x64xbf16, #tpu.memory_space<vmem>>, vector<1x4x64xbf16>
    %5 = vector.shape_cast %4 : vector<1x4x64xbf16> to vector<4x64xbf16>
    %cst_6 = arith.constant dense<0.000000e+00> : vector<16x64xf32>
    %6 = tpu.matmul %3, %5, %cst_6 {dimension_numbers = #tpu.dot_dimension_numbers<[1], [0], [0], [1], [0, 0, 1, 1], [], []>} : vector<16x4xbf16>, vector<4x64xbf16>, vector<16x64xf32> -> vector<16x64xf32>
    %7 = arith.addf %0, %6 : vector<16x64xf32>
    %8 = vector.extract_strided_slice %2 {offsets = [1, 0], sizes = [16, 4], strides = [1, 1]} : vector<18x4xbf16> to vector<16x4xbf16>
    %c1 = arith.constant 1 : index
    %c0_7 = arith.constant 0 : index
    %c0_8 = arith.constant 0 : index
    %9 = vector.load %arg6[%c1, %c0_7, %c0_8] : memref<9x4x64xbf16, #tpu.memory_space<vmem>>, vector<1x4x64xbf16>
    %10 = vector.shape_cast %9 : vector<1x4x64xbf16> to vector<4x64xbf16>
    %cst_9 = arith.constant dense<0.000000e+00> : vector<16x64xf32>
    %11 = tpu.matmul %8, %10, %cst_9 {dimension_numbers = #tpu.dot_dimension_numbers<[1], [0], [0], [1], [0, 0, 1, 1], [], []>} : vector<16x4xbf16>, vector<4x64xbf16>, vector<16x64xf32> -> vector<16x64xf32>
    %12 = arith.addf %7, %11 : vector<16x64xf32>
    %13 = vector.extract_strided_slice %2 {offsets = [2, 0], sizes = [16, 4], strides = [1, 1]} : vector<18x4xbf16> to vector<16x4xbf16>
    %c2 = arith.constant 2 : index
    %c0_10 = arith.constant 0 : index
    %c0_11 = arith.constant 0 : index
    %14 = vector.load %arg6[%c2, %c0_10, %c0_11] : memref<9x4x64xbf16, #tpu.memory_space<vmem>>, vector<1x4x64xbf16>
    %15 = vector.shape_cast %14 : vector<1x4x64xbf16> to vector<4x64xbf16>
    %cst_12 = arith.constant dense<0.000000e+00> : vector<16x64xf32>
    %16 = tpu.matmul %13, %15, %cst_12 {dimension_numbers = #tpu.dot_dimension_numbers<[1], [0], [0], [1], [0, 0, 1, 1], [], []>} : vector<16x4xbf16>, vector<4x64xbf16>, vector<16x64xf32> -> vector<16x64xf32>
    %17 = arith.addf %12, %16 : vector<16x64xf32>
    %c0_13 = arith.constant 0 : index
    %c0_14 = arith.constant 0 : index
    %c0_15 = arith.constant 0 : index
    %c0_16 = arith.constant 0 : index
    %18 = vector.load %arg4[%c0_13, %c0_14, %c0_15, %c0_16] : memref<1x1x18x4xbf16, #tpu.memory_space<vmem>>, vector<1x1x18x4xbf16>
    %19 = vector.shape_cast %18 : vector<1x1x18x4xbf16> to vector<18x4xbf16>
    %20 = vector.extract_strided_slice %19 {offsets = [0, 0], sizes = [16, 4], strides = [1, 1]} : vector<18x4xbf16> to vector<16x4xbf16>
    %c3 = arith.constant 3 : index
    %c0_17 = arith.constant 0 : index
    %c0_18 = arith.constant 0 : index
    %21 = vector.load %arg6[%c3, %c0_17, %c0_18] : memref<9x4x64xbf16, #tpu.memory_space<vmem>>, vector<1x4x64xbf16>
    %22 = vector.shape_cast %21 : vector<1x4x64xbf16> to vector<4x64xbf16>
    %cst_19 = arith.constant dense<0.000000e+00> : vector<16x64xf32>
    %23 = tpu.matmul %20, %22, %cst_19 {dimension_numbers = #tpu.dot_dimension_numbers<[1], [0], [0], [1], [0, 0, 1, 1], [], []>} : vector<16x4xbf16>, vector<4x64xbf16>, vector<16x64xf32> -> vector<16x64xf32>
    %24 = arith.addf %17, %23 : vector<16x64xf32>
    %25 = vector.extract_strided_slice %19 {offsets = [1, 0], sizes = [16, 4], strides = [1, 1]} : vector<18x4xbf16> to vector<16x4xbf16>
    %c4 = arith.constant 4 : index
    %c0_20 = arith.constant 0 : index
    %c0_21 = arith.constant 0 : index
    %26 = vector.load %arg6[%c4, %c0_20, %c0_21] : memref<9x4x64xbf16, #tpu.memory_space<vmem>>, vector<1x4x64xbf16>
    %27 = vector.shape_cast %26 : vector<1x4x64xbf16> to vector<4x64xbf16>
    %cst_22 = arith.constant dense<0.000000e+00> : vector<16x64xf32>
    %28 = tpu.matmul %25, %27, %cst_22 {dimension_numbers = #tpu.dot_dimension_numbers<[1], [0], [0], [1], [0, 0, 1, 1], [], []>} : vector<16x4xbf16>, vector<4x64xbf16>, vector<16x64xf32> -> vector<16x64xf32>
    %29 = arith.addf %24, %28 : vector<16x64xf32>
    %30 = vector.extract_strided_slice %19 {offsets = [2, 0], sizes = [16, 4], strides = [1, 1]} : vector<18x4xbf16> to vector<16x4xbf16>
    %c5 = arith.constant 5 : index
    %c0_23 = arith.constant 0 : index
    %c0_24 = arith.constant 0 : index
    %31 = vector.load %arg6[%c5, %c0_23, %c0_24] : memref<9x4x64xbf16, #tpu.memory_space<vmem>>, vector<1x4x64xbf16>
    %32 = vector.shape_cast %31 : vector<1x4x64xbf16> to vector<4x64xbf16>
    %cst_25 = arith.constant dense<0.000000e+00> : vector<16x64xf32>
    %33 = tpu.matmul %30, %32, %cst_25 {dimension_numbers = #tpu.dot_dimension_numbers<[1], [0], [0], [1], [0, 0, 1, 1], [], []>} : vector<16x4xbf16>, vector<4x64xbf16>, vector<16x64xf32> -> vector<16x64xf32>
    %34 = arith.addf %29, %33 : vector<16x64xf32>
    %c0_26 = arith.constant 0 : index
    %c0_27 = arith.constant 0 : index
    %c0_28 = arith.constant 0 : index
    %c0_29 = arith.constant 0 : index
    %35 = vector.load %arg5[%c0_26, %c0_27, %c0_28, %c0_29] : memref<1x1x18x4xbf16, #tpu.memory_space<vmem>>, vector<1x1x18x4xbf16>
    %36 = vector.shape_cast %35 : vector<1x1x18x4xbf16> to vector<18x4xbf16>
    %37 = vector.extract_strided_slice %36 {offsets = [0, 0], sizes = [16, 4], strides = [1, 1]} : vector<18x4xbf16> to vector<16x4xbf16>
    %c6 = arith.constant 6 : index
    %c0_30 = arith.constant 0 : index
    %c0_31 = arith.constant 0 : index
    %38 = vector.load %arg6[%c6, %c0_30, %c0_31] : memref<9x4x64xbf16, #tpu.memory_space<vmem>>, vector<1x4x64xbf16>
    %39 = vector.shape_cast %38 : vector<1x4x64xbf16> to vector<4x64xbf16>
    %cst_32 = arith.constant dense<0.000000e+00> : vector<16x64xf32>
    %40 = tpu.matmul %37, %39, %cst_32 {dimension_numbers = #tpu.dot_dimension_numbers<[1], [0], [0], [1], [0, 0, 1, 1], [], []>} : vector<16x4xbf16>, vector<4x64xbf16>, vector<16x64xf32> -> vector<16x64xf32>
    %41 = arith.addf %34, %40 : vector<16x64xf32>
    %42 = vector.extract_strided_slice %36 {offsets = [1, 0], sizes = [16, 4], strides = [1, 1]} : vector<18x4xbf16> to vector<16x4xbf16>
    %c7 = arith.constant 7 : index
    %c0_33 = arith.constant 0 : index
    %c0_34 = arith.constant 0 : index
    %43 = vector.load %arg6[%c7, %c0_33, %c0_34] : memref<9x4x64xbf16, #tpu.memory_space<vmem>>, vector<1x4x64xbf16>
    %44 = vector.shape_cast %43 : vector<1x4x64xbf16> to vector<4x64xbf16>
    %cst_35 = arith.constant dense<0.000000e+00> : vector<16x64xf32>
    %45 = tpu.matmul %42, %44, %cst_35 {dimension_numbers = #tpu.dot_dimension_numbers<[1], [0], [0], [1], [0, 0, 1, 1], [], []>} : vector<16x4xbf16>, vector<4x64xbf16>, vector<16x64xf32> -> vector<16x64xf32>
    %46 = arith.addf %41, %45 : vector<16x64xf32>
    %47 = vector.extract_strided_slice %36 {offsets = [2, 0], sizes = [16, 4], strides = [1, 1]} : vector<18x4xbf16> to vector<16x4xbf16>
    %c8 = arith.constant 8 : index
    %c0_36 = arith.constant 0 : index
    %c0_37 = arith.constant 0 : index
    %48 = vector.load %arg6[%c8, %c0_36, %c0_37] : memref<9x4x64xbf16, #tpu.memory_space<vmem>>, vector<1x4x64xbf16>
    %49 = vector.shape_cast %48 : vector<1x4x64xbf16> to vector<4x64xbf16>
    %cst_38 = arith.constant dense<0.000000e+00> : vector<16x64xf32>
    %50 = tpu.matmul %47, %49, %cst_38 {dimension_numbers = #tpu.dot_dimension_numbers<[1], [0], [0], [1], [0, 0, 1, 1], [], []>} : vector<16x4xbf16>, vector<4x64xbf16>, vector<16x64xf32> -> vector<16x64xf32>
    %51 = arith.addf %46, %50 : vector<16x64xf32>
    %c0_39 = arith.constant 0 : index
    %c0_40 = arith.constant 0 : index
    %52 = vector.load %arg7[%c0_39, %c0_40] : memref<1x64xf32, #tpu.memory_space<vmem>>, vector<1x64xf32>
    %53 = vector.broadcast %52 : vector<1x64xf32> to vector<16x64xf32>
    %54 = arith.addf %51, %53 : vector<16x64xf32>
    %cst_41 = arith.constant 0.000000e+00 : f32
    %55 = vector.broadcast %cst_41 : f32 to vector<16x64xf32>
    %56 = arith.maximumf %54, %55 : vector<16x64xf32>
    %57 = arith.truncf %56 : vector<16x64xf32> to vector<16x64xbf16>
    %c0_42 = arith.constant 0 : index
    %c0_43 = arith.constant 0 : index
    %c0_44 = arith.constant 0 : index
    %c0_45 = arith.constant 0 : index
    %58 = vector.load %arg8[%c0_42, %c0_43, %c0_44, %c0_45] : memref<1x1x16x64xbf16, #tpu.memory_space<vmem>>, vector<1x1x16x64xbf16>
    %59 = vector.shape_cast %58 : vector<1x1x16x64xbf16> to vector<16x64xbf16>
    %60 = vector.shape_cast %57 : vector<16x64xbf16> to vector<1x1x16x64xbf16>
    tpu.vector_store %arg8[%c0_42, %c0_43, %c0_44, %c0_45], %60 {strides = array<i32>} : memref<1x1x16x64xbf16, #tpu.memory_space<vmem>>, vector<1x1x16x64xbf16>,
    return
  }
  func.func @transform_0(%arg0: i32, %arg1: i32, %arg2: i32) -> (i32, i32, i32, i32) {
    %c0_i32 = arith.constant 0 : i32
    %0 = arith.addi %arg2, %c0_i32 : i32
    %c0_i32_0 = arith.constant 0 : i32
    %c0_i32_1 = arith.constant 0 : i32
    %c0_i32_2 = arith.constant 0 : i32
    return %arg1, %0, %c0_i32_0, %c0_i32_1 : i32, i32, i32, i32
  }
  func.func @transform_1(%arg0: i32, %arg1: i32, %arg2: i32) -> (i32, i32, i32, i32) {
    %c1_i32 = arith.constant 1 : i32
    %0 = arith.addi %arg2, %c1_i32 : i32
    %c0_i32 = arith.constant 0 : i32
    %c0_i32_0 = arith.constant 0 : i32
    %c0_i32_1 = arith.constant 0 : i32
    return %arg1, %0, %c0_i32, %c0_i32_0 : i32, i32, i32, i32
  }
  func.func @transform_2(%arg0: i32, %arg1: i32, %arg2: i32) -> (i32, i32, i32, i32) {
    %c2_i32 = arith.constant 2 : i32
    %0 = arith.addi %arg2, %c2_i32 : i32
    %c0_i32 = arith.constant 0 : i32
    %c0_i32_0 = arith.constant 0 : i32
    %c0_i32_1 = arith.constant 0 : i32
    return %arg1, %0, %c0_i32, %c0_i32_0 : i32, i32, i32, i32
  }
  func.func @transform_3(%arg0: i32, %arg1: i32, %arg2: i32) -> (i32, i32, i32) {
    %c0_i32 = arith.constant 0 : i32
    %c0_i32_0 = arith.constant 0 : i32
    %c0_i32_1 = arith.constant 0 : i32
    return %c0_i32, %c0_i32_0, %arg0 : i32, i32, i32
  }
  func.func @transform_4(%arg0: i32, %arg1: i32, %arg2: i32) -> (i32, i32) {
    %c0_i32 = arith.constant 0 : i32
    %c0_i32_0 = arith.constant 0 : i32
    return %c0_i32, %arg0 : i32, i32
  }
  func.func @transform_5(%arg0: i32, %arg1: i32, %arg2: i32) -> (i32, i32, i32, i32) {
    %c0_i32 = arith.constant 0 : i32
    %c0_i32_0 = arith.constant 0 : i32
    return %arg1, %arg2, %c0_i32, %arg0 : i32, i32, i32, i32
  }
}

</mosaic_0001>

<llo_original>
// kernel: tpu_custom_call.1
$region0: #{tpu_custom_call.1}
  #allocation0 [shape = 'u32[]', space=smem, size = 0x4, offset = 0x4, fixed_abs, tag = 'smem constant byte address 0x4 - core index']
  #allocation1 [shape = 'u32[72,128]{1,0:T(1,128)}', space=vmem, size = 0x9000, scoped, tag = 'internal scratch']
  %s0 = inlined_call_operand.vmem [shape: bf16[2,18,18,4], index: 0, kind: input, shape index: {}]
  %s1 = inlined_call_operand.vmem [shape: bf16[2,18,18,4], index: 1, kind: input, shape index: {}]
  %s2 = inlined_call_operand.vmem [shape: bf16[2,18,18,4], index: 2, kind: input, shape index: {}]
  %s3 = inlined_call_operand.vmem [shape: bf16[9,4,64], index: 3, kind: input, shape index: {}]
  %s4 = inlined_call_operand.vmem [shape: f32[1,64], index: 4, kind: input, shape index: {}]
  %s5 = inlined_call_operand.hbm [shape: bf16[2,16,16,64], index: 5, kind: output, shape index: {}]
  %s6 = sld [smem:[#allocation0]]
  $region53: #{tpu_custom_call.1} parent=0
    _
  %s8 = ssub.s32 1, %s6
  %s9 = scalar_select 0, %s8, %s6
  $region1: #{tpu_custom_call.1} parent=0
    #allocation2 [shape = 'u8[8192]{0}', space=vmem, size = 0x2000, scoped, tag = 'output window, operand 0']
    #allocation3 [shape = 's32[2]{0}', space=sflag, size = 0x8, scoped, tag = 'scoped memory for tpu_custom_call.1']
    %10 = vsyncpa [#allocation3], 0
    %s11 = scalar_lea.sflag [#allocation3], 1
    %12 = vsyncpa %s11, 0
    loop: start=0, step=1, limit=34
    $region2: #{tpu_custom_call.1} parent=1 // loop_pre_header
      _
    $region3: #{tpu_custom_call.1} parent=1 // loop_header
      %s14 = sphi 0, %s18
      %p15 = scmp.ge.s32.totalorder %s14, 34
      %s21 = sphi 0, %s40
      %s22 = sphi 0, %s36
      %s23 = sphi 0, %s32
      %s24 = sphi 0, %s21
      %s25 = sphi 0, %s22
      %s26 = sphi 0, %s23
      %s27 = sphi 0, %s24
      %s28 = sphi 0, %s25
      %s29 = sphi 0, %s26
      %s45 = sphi 0, %s47
      %s48 = sphi 0, %s45
      %s49 = sphi 0, %s48
      %s65 = sphi 0, %s49
      %s75 = sphi 0, %s77
      %s78 = sphi 0, %s75
      %s79 = sphi 0, %s78
      %s95 = sphi 0, %s79
      %s105 = sphi 0, %s107
      %s108 = sphi 0, %s105
      %s109 = sphi 0, %s108
      %s125 = sphi 0, %s109
      %s131 = sphi 0, %s133
      %s134 = sphi 0, %s131
      %s135 = sphi 0, %s134
      %s151 = sphi 0, %s135
      %s157 = sphi 0, %s159
      %s160 = sphi 0, %s157
      %s161 = sphi 0, %s160
      %s177 = sphi 0, %s161
      %s187 = sphi 0, %s189
      %s190 = sphi 0, %s187
      %s191 = sphi 0, %s190
      %s207 = sphi 0, %s191
    $region4: #{tpu_custom_call.1} parent=1 // loop_header_branch
      %17 = sbr.rel (%p15) target = $region8
    $region5: #{tpu_custom_call.1} parent=1 // loop_body
      %s19 = ssub.s32 %s14, 1
      %s20 = ssub.s32 %s14, 2
      %s30 = sadd.s32 1, %s23
      %p31 = scmp.ge.s32.totalorder %s30, 16
      %s32 = scalar_select %p31, 0, %s30
      %s33 = sadd.s32 1, %s22
      %s34 = scalar_select %p31, %s33, %s22
      %p35 = scmp.ge.s32.totalorder %s34, 2
      %s36 = scalar_select %p35, 0, %s34
      %s37 = sadd.s32 1, %s21
      %s38 = scalar_select %p35, %s37, %s21
      %p39 = scmp.ge.s32.totalorder %s38, 1
      %s40 = scalar_select %p39, 0, %s38
      %s41 = ssub.s32 %s22, %s36
      %s42 = ssub.s32 %s23, %s32
      %s43 = sor.u32 %s41, %s42
      %p44 = scmp.eq.s32.totalorder %s43, 0
      %s46 = sadd.s32 %s45, 1
      %s47 = scalar_select %p44, %s45, %s46
      %p50 = pneg %p44
      %p51 = scmp.eq.s32.totalorder %s14, 31
      %p52 = por %p50, %p51
      %p53 = scmp.ne.s32.totalorder %s45, %s48
      %p54 = scmp.eq.s32.totalorder %s14, 0
      %p55 = por %p53, %p54
      %p56 = scmp.ne.s32.totalorder %s45, %s48
      %p57 = scmp.eq.s32.totalorder %s19, 31
      %p58 = por %p56, %p57
      %p59 = scmp.ne.s32.totalorder %s48, %s49
      %p60 = scmp.eq.s32.totalorder %s19, 0
      %p61 = por %p59, %p60
      %p62 = scmp.ne.s32.totalorder %s48, %s49
      %p63 = scmp.eq.s32.totalorder %s20, 31
      %p64 = por %p62, %p63
      %p66 = scmp.ne.s32.totalorder %s49, %s65
      %p67 = scmp.eq.s32.totalorder %s20, 0
      %p68 = por %p66, %p67
      %s69 = sadd.s32 %s23, 1
      %s70 = sadd.s32 %s32, 1
      %s71 = ssub.s32 %s22, %s36
      %s72 = ssub.s32 %s69, %s70
      %s73 = sor.u32 %s71, %s72
      %p74 = scmp.eq.s32.totalorder %s73, 0
      %s76 = sadd.s32 %s75, 1
      %s77 = scalar_select %p74, %s75, %s76
      %p80 = pneg %p74
      %p81 = scmp.eq.s32.totalorder %s14, 31
      %p82 = por %p80, %p81
      %p83 = scmp.ne.s32.totalorder %s75, %s78
      %p84 = scmp.eq.s32.totalorder %s14, 0
      %p85 = por %p83, %p84
      %p86 = scmp.ne.s32.totalorder %s75, %s78
      %p87 = scmp.eq.s32.totalorder %s19, 31
      %p88 = por %p86, %p87
      %p89 = scmp.ne.s32.totalorder %s78, %s79
      %p90 = scmp.eq.s32.totalorder %s19, 0
      %p91 = por %p89, %p90
      %p92 = scmp.ne.s32.totalorder %s78, %s79
      %p93 = scmp.eq.s32.totalorder %s20, 31
      %p94 = por %p92, %p93
      %p96 = scmp.ne.s32.totalorder %s79, %s95
      %p97 = scmp.eq.s32.totalorder %s20, 0
      %p98 = por %p96, %p97
      %s99 = sadd.s32 %s23, 2
      %s100 = sadd.s32 %s32, 2
      %s101 = ssub.s32 %s22, %s36
      %s102 = ssub.s32 %s99, %s100
      %s103 = sor.u32 %s101, %s102
      %p104 = scmp.eq.s32.totalorder %s103, 0
      %s106 = sadd.s32 %s105, 1
      %s107 = scalar_select %p104, %s105, %s106
      %p110 = pneg %p104
      %p111 = scmp.eq.s32.totalorder %s14, 31
      %p112 = por %p110, %p111
      %p113 = scmp.ne.s32.totalorder %s105, %s108
      %p114 = scmp.eq.s32.totalorder %s14, 0
      %p115 = por %p113, %p114
      %p116 = scmp.ne.s32.totalorder %s105, %s108
      %p117 = scmp.eq.s32.totalorder %s19, 31
      %p118 = por %p116, %p117
      %p119 = scmp.ne.s32.totalorder %s108, %s109
      %p120 = scmp.eq.s32.totalorder %s19, 0
      %p121 = por %p119, %p120
      %p122 = scmp.ne.s32.totalorder %s108, %s109
      %p123 = scmp.eq.s32.totalorder %s20, 31
      %p124 = por %p122, %p123
      %p126 = scmp.ne.s32.totalorder %s109, %s125
      %p127 = scmp.eq.s32.totalorder %s20, 0
      %p128 = por %p126, %p127
      %s129 = ssub.s32 %s21, %s40
      %p130 = scmp.eq.s32.totalorder %s129, 0
      %s132 = sadd.s32 %s131, 1
      %s133 = scalar_select %p130, %s131, %s132
      %p136 = pneg %p130
      %p137 = scmp.eq.s32.totalorder %s14, 31
      %p138 = por %p136, %p137
      %p139 = scmp.ne.s32.totalorder %s131, %s134
      %p140 = scmp.eq.s32.totalorder %s14, 0
      %p141 = por %p139, %p140
      %p142 = scmp.ne.s32.totalorder %s131, %s134
      %p143 = scmp.eq.s32.totalorder %s19, 31
      %p144 = por %p142, %p143
      %p145 = scmp.ne.s32.totalorder %s134, %s135
      %p146 = scmp.eq.s32.totalorder %s19, 0
      %p147 = por %p145, %p146
      %p148 = scmp.ne.s32.totalorder %s134, %s135
      %p149 = scmp.eq.s32.totalorder %s20, 31
      %p150 = por %p148, %p149
      %p152 = scmp.ne.s32.totalorder %s135, %s151
      %p153 = scmp.eq.s32.totalorder %s20, 0
      %p154 = por %p152, %p153
      %s155 = ssub.s32 %s21, %s40
      %p156 = scmp.eq.s32.totalorder %s155, 0
      %s158 = sadd.s32 %s157, 1
      %s159 = scalar_select %p156, %s157, %s158
      %p162 = pneg %p156
      %p163 = scmp.eq.s32.totalorder %s14, 31
      %p164 = por %p162, %p163
      %p165 = scmp.ne.s32.totalorder %s157, %s160
      %p166 = scmp.eq.s32.totalorder %s14, 0
      %p167 = por %p165, %p166
      %p168 = scmp.ne.s32.totalorder %s157, %s160
      %p169 = scmp.eq.s32.totalorder %s19, 31
      %p170 = por %p168, %p169
      %p171 = scmp.ne.s32.totalorder %s160, %s161
      %p172 = scmp.eq.s32.totalorder %s19, 0
      %p173 = por %p171, %p172
      %p174 = scmp.ne.s32.totalorder %s160, %s161
      %p175 = scmp.eq.s32.totalorder %s20, 31
      %p176 = por %p174, %p175
      %p178 = scmp.ne.s32.totalorder %s161, %s177
      %p179 = scmp.eq.s32.totalorder %s20, 0
      %p180 = por %p178, %p179
      %s181 = ssub.s32 %s22, %s36
      %s182 = ssub.s32 %s23, %s32
      %s183 = sor.u32 %s181, %s182
      %s184 = ssub.s32 %s21, %s40
      %s185 = sor.u32 %s183, %s184
      %p186 = scmp.eq.s32.totalorder %s185, 0
      %s188 = sadd.s32 %s187, 1
      %s189 = scalar_select %p186, %s187, %s188
      %p192 = pneg %p186
      %p193 = scmp.eq.s32.totalorder %s14, 31
      %p194 = por %p192, %p193
      %p195 = scmp.ne.s32.totalorder %s187, %s190
      %p196 = scmp.eq.s32.totalorder %s14, 0
      %p197 = por %p195, %p196
      %p198 = scmp.ne.s32.totalorder %s187, %s190
      %p199 = scmp.eq.s32.totalorder %s19, 31
      %p200 = por %p198, %p199
      %p201 = scmp.ne.s32.totalorder %s190, %s191
      %p202 = scmp.eq.s32.totalorder %s19, 0
      %p203 = por %p201, %p202
      %p204 = scmp.ne.s32.totalorder %s190, %s191
      %p205 = scmp.eq.s32.totalorder %s20, 31
      %p206 = por %p204, %p205
      %p208 = scmp.ne.s32.totalorder %s191, %s207
      %p209 = scmp.eq.s32.totalorder %s20, 0
      %p210 = por %p208, %p209
      %p211 = scmp.le.s32.totalorder 1, %s14
      %p212 = scmp.lt.s32.totalorder %s14, 33
      %p213 = pnand %p211, %p212
      %p214 = pneg %p213
      // Predicated region
      $region9: #{tpu_custom_call.1} parent=5 // pred_check
        _
      $region10: #{tpu_custom_call.1} parent=5 // pred_check_branch
        %216 = sbr.rel (%p213) target = $region12
      $region11: #{tpu_custom_call.1} parent=5 // pred_region
        %s217 = ssub.s32 %s14, 1
        // Predicated region
        $region13: #{tpu_custom_call.1} parent=11 // pred_check
          %p218 = pneg %p147
        $region14: #{tpu_custom_call.1} parent=11 // pred_check_branch
          %220 = sbr.rel (%p218) target = $region16
        $region15: #{tpu_custom_call.1} parent=11 // pred_region
          %p221 = scmp.lt.s32.totalorder %s24, 0
          %s222 = scalar_select %p221, %s24, 0
          %s223 = smul.addr %s222, 2
          %s224 = scalar_lea.vmem %s3, %s223
        $region16: #{tpu_custom_call.1} parent=11 // pred_fallthru
          _
        // Predicated region
        $region17: #{tpu_custom_call.1} parent=11 // pred_check
          %p225 = pneg %p173
        $region18: #{tpu_custom_call.1} parent=11 // pred_check_branch
          %227 = sbr.rel (%p225) target = $region20
        $region19: #{tpu_custom_call.1} parent=11 // pred_region
          %p228 = scmp.lt.s32.totalorder %s24, 0
          %s229 = scalar_select %p228, %s24, 0
          %s230 = scalar_lea.vmem %s4, %s229
        $region20: #{tpu_custom_call.1} parent=11 // pred_fallthru
          _
      $region12: #{tpu_custom_call.1} parent=5 // pred_fallthru
        _
      %p231 = scmp.lt.s32.totalorder %s14, 32
      // Predicated region
      $region21: #{tpu_custom_call.1} parent=5 // pred_check
        %p232 = pneg %p231
      $region22: #{tpu_custom_call.1} parent=5 // pred_check_branch
        %234 = sbr.rel (%p232) target = $region24
      $region23: #{tpu_custom_call.1} parent=5 // pred_region
        // Predicated region
        $region25: #{tpu_custom_call.1} parent=23 // pred_check
          %p235 = pneg %p55
        $region26: #{tpu_custom_call.1} parent=23 // pred_check_branch
          %237 = sbr.rel (%p235) target = $region28
        $region27: #{tpu_custom_call.1} parent=23 // pred_region
          %p238 = scmp.lt.s32.totalorder %s22, 1
          %s239 = scalar_select %p238, %s22, 1
          %p240 = scmp.lt.s32.totalorder %s23, 17
          %s241 = scalar_select %p240, %s23, 17
          %s242 = smul.addr %s241, 3
          %s243 = smul.addr %s239, 54
          %s244 = sadd.s32 %s242, %s243
          %s245 = smul.addr %s244, 4
          %s246 = scalar_lea.vmem %s0, %s245
        $region28: #{tpu_custom_call.1} parent=23 // pred_fallthru
          _
        // Predicated region
        $region29: #{tpu_custom_call.1} parent=23 // pred_check
          %p247 = pneg %p85
        $region30: #{tpu_custom_call.1} parent=23 // pred_check_branch
          %249 = sbr.rel (%p247) target = $region32
        $region31: #{tpu_custom_call.1} parent=23 // pred_region
          %s250 = sadd.s32 %s23, 1
          %p251 = scmp.lt.s32.totalorder %s22, 1
          %s252 = scalar_select %p251, %s22, 1
          %p253 = scmp.lt.s32.totalorder %s250, 17
          %s254 = scalar_select %p253, %s250, 17
          %s255 = smul.addr %s254, 3
          %s256 = smul.addr %s252, 54
          %s257 = sadd.s32 %s255, %s256
          %s258 = smul.addr %s257, 4
          %s259 = scalar_lea.vmem %s1, %s258
          %s260 = sadd.s32 %s23, 1
        $region32: #{tpu_custom_call.1} parent=23 // pred_fallthru
          _
        // Predicated region
        $region33: #{tpu_custom_call.1} parent=23 // pred_check
          %p261 = pneg %p115
        $region34: #{tpu_custom_call.1} parent=23 // pred_check_branch
          %263 = sbr.rel (%p261) target = $region36
        $region35: #{tpu_custom_call.1} parent=23 // pred_region
          %s264 = sadd.s32 %s23, 2
          %p265 = scmp.lt.s32.totalorder %s22, 1
          %s266 = scalar_select %p265, %s22, 1
          %p267 = scmp.lt.s32.totalorder %s264, 17
          %s268 = scalar_select %p267, %s264, 17
          %s269 = smul.addr %s268, 3
          %s270 = smul.addr %s266, 54
          %s271 = sadd.s32 %s269, %s270
          %s272 = smul.addr %s271, 4
          %s273 = scalar_lea.vmem %s2, %s272
          %s274 = sadd.s32 %s23, 2
        $region36: #{tpu_custom_call.1} parent=23 // pred_fallthru
          _
      $region24: #{tpu_custom_call.1} parent=5 // pred_fallthru
        _
      %p275 = scmp.le.s32.totalorder 1, %s14
      %p276 = scmp.lt.s32.totalorder %s14, 33
      %p277 = pnand %p275, %p276
      %p278 = pneg %p277
      // Predicated region
      $region37: #{tpu_custom_call.1} parent=5 // pred_check
        _
      $region38: #{tpu_custom_call.1} parent=5 // pred_check_branch
        %280 = sbr.rel (%p277) target = $region40
      $region39: #{tpu_custom_call.1} parent=5 // pred_region
        %s281 = ssub.s32 %s14, 1
        %p282 = scmp.lt.s32.totalorder %s25, 1
        %s283 = scalar_select %p282, %s25, 1
        %p284 = scmp.lt.s32.totalorder %s26, 17
        %s285 = scalar_select %p284, %s26, 17
        %s286 = smul.addr %s285, 3
        %s287 = smul.addr %s283, 54
        %s288 = sadd.s32 %s286, %s287
        %s289 = smul.addr %s288, 4
        %s290 = scalar_lea.vmem %s0, %s289
        %p291 = pneg %p61
        %p292 = pneg %p58
        %s293 = sadd.s32 %s26, 1
        %p294 = scmp.lt.s32.totalorder %s25, 1
        %s295 = scalar_select %p294, %s25, 1
        %p296 = scmp.lt.s32.totalorder %s293, 17
        %s297 = scalar_select %p296, %s293, 17
        %s298 = smul.addr %s297, 3
        %s299 = smul.addr %s295, 54
        %s300 = sadd.s32 %s298, %s299
        %s301 = smul.addr %s300, 4
        %s302 = scalar_lea.vmem %s1, %s301
        %p303 = pneg %p91
        %p304 = pneg %p88
        %s305 = sadd.s32 %s26, 2
        %p306 = scmp.lt.s32.totalorder %s25, 1
        %s307 = scalar_select %p306, %s25, 1
        %p308 = scmp.lt.s32.totalorder %s305, 17
        %s309 = scalar_select %p308, %s305, 17
        %s310 = smul.addr %s309, 3
        %s311 = smul.addr %s307, 54
        %s312 = sadd.s32 %s310, %s311
        %s313 = smul.addr %s312, 4
        %s314 = scalar_lea.vmem %s2, %s313
        %p315 = pneg %p121
        %p316 = pneg %p118
        %p317 = scmp.lt.s32.totalorder %s24, 0
        %s318 = scalar_select %p317, %s24, 0
        %s319 = smul.addr %s318, 2
        %s320 = scalar_lea.vmem %s3, %s319
        %p321 = pneg %p147
        %p322 = pneg %p144
        %p323 = scmp.lt.s32.totalorder %s24, 0
        %s324 = scalar_select %p323, %s24, 0
        %s325 = scalar_lea.vmem %s4, %s324
        %p326 = pneg %p173
        %p327 = pneg %p170
        %p328 = pneg %p203
        %p329 = pneg %p200
        %s330 = sand.u32 %s190, 1
        %s331 = scalar_lea.sflag [#allocation3], %s330
        %s332 = sand.u32 %s190, 1
        %s333 = smul.addr %s332, 8
        %s334 = scalar_lea.vmem [#allocation2], %s333
        %p335 = scmp.lt.s32.totalorder %s25, 1
        %s336 = scalar_select %p335, %s25, 1
        %p337 = scmp.lt.s32.totalorder %s26, 17
        %s338 = scalar_select %p337, %s26, 17
        %s339 = smul.addr %s338, 3
        %s340 = smul.addr %s336, 54
        %s341 = sadd.s32 %s339, %s340
        %s342 = smul.addr %s341, 4
        %s343 = scalar_lea.vmem %s0, %s342
        %s344 = sadd.s32 %s26, 1
        %p345 = scmp.lt.s32.totalorder %s25, 1
        %s346 = scalar_select %p345, %s25, 1
        %p347 = scmp.lt.s32.totalorder %s344, 17
        %s348 = scalar_select %p347, %s344, 17
        %s349 = smul.addr %s348, 3
        %s350 = smul.addr %s346, 54
        %s351 = sadd.s32 %s349, %s350
        %s352 = smul.addr %s351, 4
        %s353 = scalar_lea.vmem %s1, %s352
        %s354 = sadd.s32 %s26, 1
        %s355 = sadd.s32 %s26, 2
        %p356 = scmp.lt.s32.totalorder %s25, 1
        %s357 = scalar_select %p356, %s25, 1
        %p358 = scmp.lt.s32.totalorder %s355, 17
        %s359 = scalar_select %p358, %s355, 17
        %s360 = smul.addr %s359, 3
        %s361 = smul.addr %s357, 54
        %s362 = sadd.s32 %s360, %s361
        %s363 = smul.addr %s362, 4
        %s364 = scalar_lea.vmem %s2, %s363
        %s365 = sadd.s32 %s26, 2
        %p366 = scmp.lt.s32.totalorder %s24, 0
        %s367 = scalar_select %p366, %s24, 0
        %s368 = smul.addr %s367, 2
        %s369 = scalar_lea.vmem %s3, %s368
        %p370 = scmp.lt.s32.totalorder %s24, 0
        %s371 = scalar_select %p370, %s24, 0
        %s372 = scalar_lea.vmem %s4, %s371
        %v374 = vld [vmem:[%s343] sm:$0xf]
        %v375 = vld [vmem:[%s343 + $0x4] sm:$0xf]
        %v376 = vld [vmem:[%s343 + $0x8] sm:$0x1]
        %v377 = vld [vmem:[%s369] sm:$0x3]
        %s378 = scalar_lea.vmem %s369, 2
        %v379 = vld [vmem:[%s378] sm:$0x3]
        %v383 = vunpack.c.l.b16 %v374
        %v384 = vunpack.c.l.b16 %v375
        %v385 = vunpack.c.l.b16 %v376
        %v386 = vpack.c.b16 %v384, %v383
        %v387 = vpack.c.b16 %v385, %v385
        %vm388 = vsmask.f32 7424
        %v390 = vshrl.u32 %v386, 16
        %v392 = vshll.u32 %v386, 16
        %v394 = vrot.slane %v392, 1
        %v395 = vor.u32 %v390, %v394
        %v397 = vshll.u32 %v387, 16
        %v399 = vrot.slane %v397, 1
        %v400 = vsel %vm388, %v395, %v399
        %vm401 = vcmask 31744
        %v403 = vsel %vm401, %v400, 0
        %vm405 = vcmask 1041408
        %v407 = vsel %vm405, %v379, 0
        %409 = vmatpush.bf16.msra.mxu0 0
        %410 = vmatpush.bf16.msra.mxu0 0
        %411 = vmatpush.bf16.msra.mxu0 0
        %412 = vmatpush.bf16.msra.mxu0 0
        %413 = vmatpush.bf16.msra.mxu0 0
        %414 = vmatpush.bf16.msra.mxu0 0
        %415 = vmatpush.bf16.msra.mxu0 0
        %416 = vmatpush.bf16.msra.mxu0 %v407
        %417 = vmatmul.bf16.gmra.mxu0 %v403
        %v418 = vpop.f32.mrf.mxu0
        %v419 = vadd.f32 0.0, %v418
        %v420 = vpop.f32.mrf.mxu0
        %v421 = vadd.f32 0.0, %v420
        %422 = vdwg.mxu0
        %v423 = vsel %vm401, %v386, 0
        %v426 = vsel %vm405, %v377, 0
        %428 = vmatpush.bf16.msra.mxu0 0
        %429 = vmatpush.bf16.msra.mxu0 0
        %430 = vmatpush.bf16.msra.mxu0 0
        %431 = vmatpush.bf16.msra.mxu0 0
        %432 = vmatpush.bf16.msra.mxu0 0
        %433 = vmatpush.bf16.msra.mxu0 0
        %434 = vmatpush.bf16.msra.mxu0 0
        %435 = vmatpush.bf16.msra.mxu0 %v426
        %436 = vmatmul.bf16.gmra.mxu0 %v423
        %v437 = vpop.f32.mrf.mxu0
        %v438 = vadd.f32 %v419, %v437
        %v439 = vpop.f32.mrf.mxu0
        %v440 = vadd.f32 %v421, %v439
        %441 = vdwg.mxu0
        %s442 = scalar_lea.vmem %s369, 4
        %v443 = vld [vmem:[%s442] sm:$0x3]
        %vm444 = vcmask 1046528
        %v445 = vrot.slane %v386, 1
        %v446 = vrot.slane %v387, 1
        %v447 = vsel %vm444, %v445, %v446
        %v449 = vsel %vm401, %v447, 0
        %v452 = vsel %vm405, %v443, 0
        %454 = vmatpush.bf16.msra.mxu0 0
        %455 = vmatpush.bf16.msra.mxu0 0
        %456 = vmatpush.bf16.msra.mxu0 0
        %457 = vmatpush.bf16.msra.mxu0 0
        %458 = vmatpush.bf16.msra.mxu0 0
        %459 = vmatpush.bf16.msra.mxu0 0
        %460 = vmatpush.bf16.msra.mxu0 0
        %461 = vmatpush.bf16.msra.mxu0 %v452
        %462 = vmatmul.bf16.gmra.mxu0 %v449
        %v463 = vpop.f32.mrf.mxu0
        %v464 = vadd.f32 0.0, %v463
        %v465 = vpop.f32.mrf.mxu0
        %v466 = vadd.f32 0.0, %v465
        %467 = vdwg.mxu0
        %v468 = vadd.f32 %v438, %v464
        %v469 = vadd.f32 %v440, %v466
        %v470 = vld [vmem:[%s353] sm:$0xf]
        %v471 = vld [vmem:[%s353 + $0x4] sm:$0xf]
        %v472 = vld [vmem:[%s353 + $0x8] sm:$0x1]
        %s473 = scalar_lea.vmem %s369, 6
        %v474 = vld [vmem:[%s473] sm:$0x3]
        %v477 = vunpack.c.l.b16 %v470
        %v478 = vunpack.c.l.b16 %v471
        %v479 = vpack.c.b16 %v478, %v477
        %v481 = vsel %vm401, %v479, 0
        %v484 = vsel %vm405, %v474, 0
        %486 = vmatpush.bf16.msra.mxu0 0
        %487 = vmatpush.bf16.msra.mxu0 0
        %488 = vmatpush.bf16.msra.mxu0 0
        %489 = vmatpush.bf16.msra.mxu0 0
        %490 = vmatpush.bf16.msra.mxu0 0
        %491 = vmatpush.bf16.msra.mxu0 0
        %492 = vmatpush.bf16.msra.mxu0 0
        %493 = vmatpush.bf16.msra.mxu0 %v484
        %494 = vmatmul.bf16.gmra.mxu0 %v481
        %v495 = vpop.f32.mrf.mxu0
        %v496 = vadd.f32 0.0, %v495
        %v497 = vpop.f32.mrf.mxu0
        %v498 = vadd.f32 0.0, %v497
        %499 = vdwg.mxu0
        %v500 = vadd.f32 %v468, %v496
        %v501 = vadd.f32 %v469, %v498
        %s502 = scalar_lea.vmem %s369, 8
        %v503 = vld [vmem:[%s502] sm:$0x3]
        %v505 = vunpack.c.l.b16 %v472
        %v506 = vpack.c.b16 %v505, %v505
        %v507 = vshrl.u32 %v479, 16
        %v509 = vshll.u32 %v479, 16
        %v511 = vrot.slane %v509, 1
        %v512 = vor.u32 %v507, %v511
        %v514 = vshll.u32 %v506, 16
        %v516 = vrot.slane %v514, 1
        %v517 = vsel %vm388, %v512, %v516
        %v519 = vsel %vm401, %v517, 0
        %v522 = vsel %vm405, %v503, 0
        %524 = vmatpush.bf16.msra.mxu0 0
        %525 = vmatpush.bf16.msra.mxu0 0
        %526 = vmatpush.bf16.msra.mxu0 0
        %527 = vmatpush.bf16.msra.mxu0 0
        %528 = vmatpush.bf16.msra.mxu0 0
        %529 = vmatpush.bf16.msra.mxu0 0
        %530 = vmatpush.bf16.msra.mxu0 0
        %531 = vmatpush.bf16.msra.mxu0 %v522
        %532 = vmatmul.bf16.gmra.mxu0 %v519
        %v533 = vpop.f32.mrf.mxu0
        %v534 = vadd.f32 0.0, %v533
        %v535 = vpop.f32.mrf.mxu0
        %v536 = vadd.f32 0.0, %v535
        %537 = vdwg.mxu0
        %v538 = vadd.f32 %v500, %v534
        %v539 = vadd.f32 %v501, %v536
        %s540 = scalar_lea.vmem %s369, 10
        %v541 = vld [vmem:[%s540] sm:$0x3]
        %v542 = vrot.slane %v479, 1
        %v543 = vrot.slane %v506, 1
        %v544 = vsel %vm444, %v542, %v543
        %v546 = vsel %vm401, %v544, 0
        %v549 = vsel %vm405, %v541, 0
        %551 = vmatpush.bf16.msra.mxu0 0
        %552 = vmatpush.bf16.msra.mxu0 0
        %553 = vmatpush.bf16.msra.mxu0 0
        %554 = vmatpush.bf16.msra.mxu0 0
        %555 = vmatpush.bf16.msra.mxu0 0
        %556 = vmatpush.bf16.msra.mxu0 0
        %557 = vmatpush.bf16.msra.mxu0 0
        %558 = vmatpush.bf16.msra.mxu0 %v549
        %559 = vmatmul.bf16.gmra.mxu0 %v546
        %v560 = vpop.f32.mrf.mxu0
        %v561 = vadd.f32 0.0, %v560
        %v562 = vpop.f32.mrf.mxu0
        %v563 = vadd.f32 0.0, %v562
        %564 = vdwg.mxu0
        %v565 = vadd.f32 %v538, %v561
        %v566 = vadd.f32 %v539, %v563
        %v567 = vld [vmem:[%s364] sm:$0xf]
        %v568 = vld [vmem:[%s364 + $0x4] sm:$0xf]
        %v569 = vld [vmem:[%s364 + $0x8] sm:$0x1]
        %s570 = scalar_lea.vmem %s369, 12
        %v571 = vld [vmem:[%s570] sm:$0x3]
        %v574 = vunpack.c.l.b16 %v567
        %v575 = vunpack.c.l.b16 %v568
        %v576 = vpack.c.b16 %v575, %v574
        %v578 = vsel %vm401, %v576, 0
        %v581 = vsel %vm405, %v571, 0
        %583 = vmatpush.bf16.msra.mxu0 0
        %584 = vmatpush.bf16.msra.mxu0 0
        %585 = vmatpush.bf16.msra.mxu0 0
        %586 = vmatpush.bf16.msra.mxu0 0
        %587 = vmatpush.bf16.msra.mxu0 0
        %588 = vmatpush.bf16.msra.mxu0 0
        %589 = vmatpush.bf16.msra.mxu0 0
        %590 = vmatpush.bf16.msra.mxu0 %v581
        %591 = vmatmul.bf16.gmra.mxu0 %v578
        %v592 = vpop.f32.mrf.mxu0
        %v593 = vadd.f32 0.0, %v592
        %v594 = vpop.f32.mrf.mxu0
        %v595 = vadd.f32 0.0, %v594
        %596 = vdwg.mxu0
        %v597 = vadd.f32 %v565, %v593
        %v598 = vadd.f32 %v566, %v595
        %s599 = scalar_lea.vmem %s369, 14
        %v600 = vld [vmem:[%s599] sm:$0x3]
        %v602 = vunpack.c.l.b16 %v569
        %v603 = vpack.c.b16 %v602, %v602
        %v604 = vshrl.u32 %v576, 16
        %v606 = vshll.u32 %v576, 16
        %v608 = vrot.slane %v606, 1
        %v609 = vor.u32 %v604, %v608
        %v611 = vshll.u32 %v603, 16
        %v613 = vrot.slane %v611, 1
        %v614 = vsel %vm388, %v609, %v613
        %v616 = vsel %vm401, %v614, 0
        %v619 = vsel %vm405, %v600, 0
        %621 = vmatpush.bf16.msra.mxu0 0
        %622 = vmatpush.bf16.msra.mxu0 0
        %623 = vmatpush.bf16.msra.mxu0 0
        %624 = vmatpush.bf16.msra.mxu0 0
        %625 = vmatpush.bf16.msra.mxu0 0
        %626 = vmatpush.bf16.msra.mxu0 0
        %627 = vmatpush.bf16.msra.mxu0 0
        %628 = vmatpush.bf16.msra.mxu0 %v619
        %629 = vmatmul.bf16.gmra.mxu0 %v616
        %v630 = vpop.f32.mrf.mxu0
        %v631 = vadd.f32 0.0, %v630
        %v632 = vpop.f32.mrf.mxu0
        %v633 = vadd.f32 0.0, %v632
        %634 = vdwg.mxu0
        %v635 = vadd.f32 %v597, %v631
        %v636 = vadd.f32 %v598, %v633
        %s637 = scalar_lea.vmem %s369, 16
        %v638 = vld [vmem:[%s637] sm:$0x3]
        %v639 = vrot.slane %v576, 1
        %v640 = vrot.slane %v603, 1
        %v641 = vsel %vm444, %v639, %v640
        %v643 = vsel %vm401, %v641, 0
        %v646 = vsel %vm405, %v638, 0
        %648 = vmatpush.bf16.msra.mxu0 0
        %649 = vmatpush.bf16.msra.mxu0 0
        %650 = vmatpush.bf16.msra.mxu0 0
        %651 = vmatpush.bf16.msra.mxu0 0
        %652 = vmatpush.bf16.msra.mxu0 0
        %653 = vmatpush.bf16.msra.mxu0 0
        %654 = vmatpush.bf16.msra.mxu0 0
        %655 = vmatpush.bf16.msra.mxu0 %v646
        %656 = vmatmul.bf16.gmra.mxu0 %v643
        %v657 = vpop.f32.mrf.mxu0
        %v658 = vadd.f32 0.0, %v657
        %v659 = vpop.f32.mrf.mxu0
        %v660 = vadd.f32 0.0, %v659
        %661 = vdwg.mxu0
        %v662 = vadd.f32 %v635, %v658
        %v663 = vadd.f32 %v636, %v660
        %v664 = vld [vmem:[%s372] sm:$0x1]
        %v666 = vperm.slane %v664, 0
        %v668 = vadd.f32 %v662, %v666
        %v669 = vadd.f32 %v663, %v666
        %v670 = vmax.f32 %v668, 0.0
        %v671 = vmax.f32 %v669, 0.0
        %v672 = vpack.c.bf16 %v670, %v670
        %v673 = vpack.c.bf16 %v671, %v671
        %vm674 = vcmask 519168
        %675 = vst.msk [vmem:[%s334] sm:$0xf] %vm674, %v672
        %676 = vst.msk [vmem:[%s334 + $0x4] sm:$0xf] %vm674, %v673
        %s677 = sand.u32 %s190, 1
        %s678 = scalar_lea.sflag [#allocation3], %s677
        %s679 = sand.u32 %s190, 1
        %s680 = smul.addr %s679, 8
        %s681 = scalar_lea.vmem [#allocation2], %s680
        // Predicated region
        $region41: #{tpu_custom_call.1} parent=39 // pred_check
          %p682 = pneg %p200
        $region42: #{tpu_custom_call.1} parent=39 // pred_check_branch
          %684 = sbr.rel (%p682) target = $region44
        $region43: #{tpu_custom_call.1} parent=39 // pred_region
          %686 = vsyncadd %s678, 0
          %s687 = smul.addr %s26, 2
          %s688 = sadd.s32 %s24, %s687
          %s689 = smul.addr %s25, 32
          %s690 = sadd.s32 %s688, %s689
          %s691 = smul.addr %s690, 4
          %s692 = scalar_lea.hbm %s5, %s691
          %s693 = sshll.u32 %s681, 4
          %s694 = int_to_ptr.vmem [resolvable:$true] %s693
          %s695 = sshll.u32 %s692, 4
          %s696 = int_to_ptr.hbm [resolvable:$true] %s695
          %701 = dma.vmem_to_hbm [thread:$0]  %s694, 128, %s696, %s678, 64, 64, 4
        $region44: #{tpu_custom_call.1} parent=39 // pred_fallthru
          _
      $region40: #{tpu_custom_call.1} parent=5 // pred_fallthru
        _
      %p702 = scmp.le.s32.totalorder 2, %s14
      // Predicated region
      $region45: #{tpu_custom_call.1} parent=5 // pred_check
        %p703 = pneg %p702
      $region46: #{tpu_custom_call.1} parent=5 // pred_check_branch
        %705 = sbr.rel (%p703) target = $region48
      $region47: #{tpu_custom_call.1} parent=5 // pred_region
        %s706 = ssub.s32 %s14, 2
        // Predicated region
        $region49: #{tpu_custom_call.1} parent=47 // pred_check
          %p707 = pneg %p206
        $region50: #{tpu_custom_call.1} parent=47 // pred_check_branch
          %709 = sbr.rel (%p707) target = $region52
        $region51: #{tpu_custom_call.1} parent=47 // pred_region
          %s710 = sand.u32 %s191, 1
          %s711 = scalar_lea.sflag [#allocation3], %s710
          %s712 = sand.u32 %s191, 1
          %s713 = smul.addr %s712, 8
          %s714 = scalar_lea.vmem [#allocation2], %s713
          %716 = dma.done %s711, 128
        $region52: #{tpu_custom_call.1} parent=47 // pred_fallthru
          _
      $region48: #{tpu_custom_call.1} parent=5 // pred_fallthru
        _
    $region6: #{tpu_custom_call.1} parent=1 // loop_footer
      %s18 = sadd.s32 1, %s14
    $region7: #{tpu_custom_call.1} parent=1 // loop_footer_branch
      %13 = sbr.rel target = $region3
    $region8: #{tpu_custom_call.1} parent=1 // loop_exit
      _
    %717 = vsyncpa [#allocation3], 1
    %s718 = scalar_lea.sflag [#allocation3], 1
    %719 = vsyncpa %s718, 1

</llo_original>
